<compile_context>
chip_gen: v7x
topology: tpu7x:2x2x1
jax: 0.10.0
libtpu: 0.0.40
codegen_flags: <defaults>
</compile_context>

<pallas_src>
import jax
import jax.numpy as jnp
from jax.experimental import pallas as pl
from jax.experimental.pallas import tpu as pltpu


def pi_net_kernel(x_ref, w0_ref, b0_ref, wh_ref, bh_ref, out_ref):
    # x_ref:  (s_dim, B)    raw state, feature-major (no transpose needed)
    # w0_ref: (h_dim, s_dim) = PyTorch fc0.weight layout
    # b0_ref: (h_dim, 1)
    # wh_ref: (2, h_dim)     = stacked [fc1_mu.weight; fc1_sigma.weight]
    # bh_ref: (2, 1)         = stacked biases
    # out_ref: (2, B)        row 0 = mu, row 1 = sigma
    x = x_ref[...]                                     # (s_dim, B)
    w0 = w0_ref[...]                                   # (h_dim, s_dim)
    s_dim = x_ref.shape[0]

    # fc0 via VPU broadcast-FMA over the tiny K = s_dim contraction
    # (avoids the full MXU push -> result-FIFO drain for a <0.1%-utilized matmul).
    acc = w0[:, 0:1] * x[0:1, :]                       # (h_dim, B)
    for k in range(1, s_dim):                          # static, s_dim is tiny
        acc = acc + w0[:, k:k + 1] * x[k:k + 1, :]
    h1 = jnp.maximum(acc + b0_ref[...], 0.0)           # (h_dim, B)

    # Fused mu/sigma heads: one MXU matmul (2, h_dim) @ (h_dim, B).
    y = jnp.dot(wh_ref[...], h1,
                preferred_element_type=jnp.float32) + bh_ref[...]   # (2, B)

    # Row 0 (mu) passes through; row 1 (sigma) gets relu + 1e-8.  Single store.
    row = jax.lax.broadcasted_iota(jnp.int32, y.shape, 0)
    out_ref[...] = jnp.where(row == 0, y, jnp.maximum(y, 0.0) + 1e-8)


def pi_net_small(state, params):
    """state: (s_dim, batch) float32 — same layout the PyTorch forward expects."""
    w0, b0, wh, bh = params
    s_dim, B = state.shape
    h_dim = w0.shape[0]

    vmem = pl.BlockSpec(memory_space=pltpu.MemorySpace.VMEM)
    cost = pl.CostEstimate(
        flops=2 * B * s_dim * h_dim + 2 * B * h_dim * 2,
        transcendentals=0,
        bytes_accessed=4 * (s_dim * B + h_dim * s_dim + h_dim
                            + 2 * h_dim + 2 + 2 * B),
    )

    out = pl.pallas_call(
        pi_net_kernel,
        out_shape=jax.ShapeDtypeStruct((2, B), jnp.float32),
        in_specs=[vmem] * 5,
        out_specs=vmem,
        cost_estimate=cost,
    )(state.astype(jnp.float32), w0, b0, wh, bh)

    mu = out[0].reshape(B, 1)       # glue only: layout plumbing in the wrapper
    sigma = out[1].reshape(B, 1)
    return mu, sigma


def init_params(key, s_dim, h_dim):
    """Deterministic synthetic parameters in PyTorch-native (out, in) layout,
    with the two heads fused into a single (2, h_dim) weight / (2, 1) bias."""
    k0, k1, k2, k3, k4, k5 = jax.random.split(key, 6)
    w0 = jax.random.normal(k0, (h_dim, s_dim), jnp.float32) * 0.1    # fc0.weight
    b0 = jax.random.normal(k1, (h_dim, 1), jnp.float32) * 0.1        # fc0.bias (col)
    wmu = jax.random.normal(k2, (1, h_dim), jnp.float32) * 0.1       # fc1_mu.weight
    bmu = jax.random.normal(k3, (1, 1), jnp.float32) * 0.1
    wsig = jax.random.normal(k4, (1, h_dim), jnp.float32) * 0.1      # fc1_sigma.weight
    bsig = jax.random.normal(k5, (1, 1), jnp.float32) * 0.1
    wh = jnp.concatenate([wmu, wsig], axis=0)                        # (2, h_dim)
    bh = jnp.concatenate([bmu, bsig], axis=0)                        # (2, 1)
    return (w0, b0, wh, bh)


def pi_net_small_ref(state, params):
    """Pure-JAX reference matching the PyTorch forward."""
    w0, b0, wh, bh = params
    x = state.T.astype(jnp.float32)                     # (B, s_dim)
    h1 = jnp.maximum(x @ w0.T + b0[:, 0], 0.0)          # (B, h_dim)
    mu = h1 @ wh[0:1].T + bh[0, 0]                      # (B, 1)
    sigma = jnp.maximum(h1 @ wh[1:2].T + bh[1, 0], 0.0) + 1e-8
    return mu, sigma


if __name__ == "__main__":
    s_dim, h_dim, batch = 3, 32, 8       # pendulum state dim, small hidden, small batch
    key = jax.random.PRNGKey(0)
    kp, kx = jax.random.split(key)

    params = init_params(kp, s_dim, h_dim)
    state = jax.random.normal(kx, (s_dim, batch), jnp.float32)   # (s_dim, B)

    mu, sigma = pi_net_small(state, params)
    jax.block_until_ready((mu, sigma))

    mu_ref, sigma_ref = pi_net_small_ref(state, params)
    assert mu.shape == (batch, 1) and sigma.shape == (batch, 1)
    assert jnp.allclose(mu, mu_ref, atol=1e-5, rtol=1e-5)
    assert jnp.allclose(sigma, sigma_ref, atol=1e-5, rtol=1e-5)
    assert bool(jnp.all(sigma > 0.0))    # sigma strictly positive (relu + 1e-8)

    print("KERNEL_OK")
</pallas_src>

<mosaic_0001>
module attributes {stable_mosaic.version = 11 : i64} {
  func.func @pi_net_kernel(%arg0: memref<3x8xf32, #tpu.memory_space<vmem>>, %arg1: memref<32x3xf32, #tpu.memory_space<vmem>>, %arg2: memref<32x1xf32, #tpu.memory_space<vmem>>, %arg3: memref<2x32xf32, #tpu.memory_space<vmem>>, %arg4: memref<2x1xf32, #tpu.memory_space<vmem>>, %arg5: memref<2x8xf32, #tpu.memory_space<vmem>>) attributes {dimension_semantics = [], scalar_prefetch = 0 : i64, scratch_operands = 0 : i64, tpu.core_type = #tpu.core_type<tc>} {
    %c0 = arith.constant 0 : index
    %c0_0 = arith.constant 0 : index
    %0 = vector.load %arg0[%c0, %c0_0] : memref<3x8xf32, #tpu.memory_space<vmem>>, vector<3x8xf32>
    %c0_1 = arith.constant 0 : index
    %c0_2 = arith.constant 0 : index
    %1 = vector.load %arg1[%c0_1, %c0_2] : memref<32x3xf32, #tpu.memory_space<vmem>>, vector<32x3xf32>
    %2 = vector.extract_strided_slice %1 {offsets = [0, 0], sizes = [32, 1], strides = [1, 1]} : vector<32x3xf32> to vector<32x1xf32>
    %3 = vector.extract_strided_slice %0 {offsets = [0, 0], sizes = [1, 8], strides = [1, 1]} : vector<3x8xf32> to vector<1x8xf32>
    %4 = vector.broadcast %2 : vector<32x1xf32> to vector<32x8xf32>
    %5 = vector.broadcast %3 : vector<1x8xf32> to vector<32x8xf32>
    %6 = arith.mulf %4, %5 : vector<32x8xf32>
    %7 = vector.extract_strided_slice %1 {offsets = [0, 1], sizes = [32, 1], strides = [1, 1]} : vector<32x3xf32> to vector<32x1xf32>
    %8 = vector.extract_strided_slice %0 {offsets = [1, 0], sizes = [1, 8], strides = [1, 1]} : vector<3x8xf32> to vector<1x8xf32>
    %9 = vector.broadcast %7 : vector<32x1xf32> to vector<32x8xf32>
    %10 = vector.broadcast %8 : vector<1x8xf32> to vector<32x8xf32>
    %11 = arith.mulf %9, %10 : vector<32x8xf32>
    %12 = arith.addf %6, %11 : vector<32x8xf32>
    %13 = vector.extract_strided_slice %1 {offsets = [0, 2], sizes = [32, 1], strides = [1, 1]} : vector<32x3xf32> to vector<32x1xf32>
    %14 = vector.extract_strided_slice %0 {offsets = [2, 0], sizes = [1, 8], strides = [1, 1]} : vector<3x8xf32> to vector<1x8xf32>
    %15 = vector.broadcast %13 : vector<32x1xf32> to vector<32x8xf32>
    %16 = vector.broadcast %14 : vector<1x8xf32> to vector<32x8xf32>
    %17 = arith.mulf %15, %16 : vector<32x8xf32>
    %18 = arith.addf %12, %17 : vector<32x8xf32>
    %c0_3 = arith.constant 0 : index
    %c0_4 = arith.constant 0 : index
    %19 = vector.load %arg2[%c0_3, %c0_4] : memref<32x1xf32, #tpu.memory_space<vmem>>, vector<32x1xf32>
    %20 = vector.broadcast %19 : vector<32x1xf32> to vector<32x8xf32>
    %21 = arith.addf %18, %20 : vector<32x8xf32>
    %cst = arith.constant 0.000000e+00 : f32
    %22 = vector.broadcast %cst : f32 to vector<32x8xf32>
    %23 = arith.maximumf %21, %22 : vector<32x8xf32>
    %c0_5 = arith.constant 0 : index
    %c0_6 = arith.constant 0 : index
    %24 = vector.load %arg3[%c0_5, %c0_6] : memref<2x32xf32, #tpu.memory_space<vmem>>, vector<2x32xf32>
    %cst_7 = arith.constant dense<0.000000e+00> : vector<2x8xf32>
    %25 = tpu.matmul %24, %23, %cst_7 {dimension_numbers = #tpu.dot_dimension_numbers<[1], [0], [0], [1], [0, 0, 1, 1], [], []>} : vector<2x32xf32>, vector<32x8xf32>, vector<2x8xf32> -> vector<2x8xf32>
    %c0_8 = arith.constant 0 : index
    %c0_9 = arith.constant 0 : index
    %26 = vector.load %arg4[%c0_8, %c0_9] : memref<2x1xf32, #tpu.memory_space<vmem>>, vector<2x1xf32>
    %27 = vector.broadcast %26 : vector<2x1xf32> to vector<2x8xf32>
    %28 = arith.addf %25, %27 : vector<2x8xf32>
    %29 = tpu.iota {dimensions = array<i32: 0>} : vector<2x8xi32>
    %c0_i32 = arith.constant 0 : i32
    %30 = vector.broadcast %c0_i32 : i32 to vector<2x8xi32>
    %31 = arith.cmpi eq, %29, %30 : vector<2x8xi32>
    %cst_10 = arith.constant 0.000000e+00 : f32
    %32 = vector.broadcast %cst_10 : f32 to vector<2x8xf32>
    %33 = arith.maximumf %28, %32 : vector<2x8xf32>
    %cst_11 = arith.constant 9.99999993E-9 : f32
    %34 = vector.broadcast %cst_11 : f32 to vector<2x8xf32>
    %35 = arith.addf %33, %34 : vector<2x8xf32>
    %36 = arith.select %31, %28, %35 : vector<2x8xi1>, vector<2x8xf32>
    %c0_12 = arith.constant 0 : index
    %c0_13 = arith.constant 0 : index
    %37 = vector.load %arg5[%c0_12, %c0_13] : memref<2x8xf32, #tpu.memory_space<vmem>>, vector<2x8xf32>
    tpu.vector_store %arg5[%c0_12, %c0_13], %36 {strides = array<i32>} : memref<2x8xf32, #tpu.memory_space<vmem>>, vector<2x8xf32>,
    return
  }
}

</mosaic_0001>

<llo_original>
// kernel: tpu_custom_call.1
$region0: #{tpu_custom_call.1}
  #allocation0 [shape = 'u32[]', space=smem, size = 0x4, offset = 0x4, fixed_abs, tag = 'smem constant byte address 0x4 - core index']
  #allocation1 [shape = 'u32[144,128]{1,0:T(1,128)}', space=vmem, size = 0x12000, scoped, tag = 'internal scratch']
  %s0 = inlined_call_operand.vmem [shape: f32[3,8], index: 0, kind: input, shape index: {}]
  %s1 = inlined_call_operand.vmem [shape: f32[32,3], index: 1, kind: input, shape index: {}]
  %s2 = inlined_call_operand.vmem [shape: f32[32,1], index: 2, kind: input, shape index: {}]
  %s3 = inlined_call_operand.vmem [shape: f32[2,32], index: 3, kind: input, shape index: {}]
  %s4 = inlined_call_operand.vmem [shape: f32[2,1], index: 4, kind: input, shape index: {}]
  %s5 = inlined_call_operand.hbm [shape: f32[2,8], index: 5, kind: output, shape index: {}]
  %s6 = sld [smem:[#allocation0]]
  $region30: #{tpu_custom_call.1} parent=0
    _
  %s8 = ssub.s32 1, %s6
  %s9 = scalar_select 0, %s8, %s6
  $region1: #{tpu_custom_call.1} parent=0
    #allocation2 [shape = 'u8[1024]{0}', space=vmem, size = 0x400, scoped, tag = 'output window, operand 0, single buffered']
    #allocation3 [shape = 's32[1]{0}', space=sflag, size = 0x4, scoped, tag = 'scoped memory for tpu_custom_call.1']
    %10 = vsyncpa [#allocation3], 0
    // Predicated region
    $region2: #{tpu_custom_call.1} parent=1 // pred_check
      _
    $region3: #{tpu_custom_call.1} parent=1 // pred_check_branch
      %12 = sbr.rel (0) target = $region5
    $region4: #{tpu_custom_call.1} parent=1 // pred_region
      _
    $region5: #{tpu_custom_call.1} parent=1 // pred_fallthru
      _
    // Predicated region
    $region6: #{tpu_custom_call.1} parent=1 // pred_check
      _
    $region7: #{tpu_custom_call.1} parent=1 // pred_check_branch
      %14 = sbr.rel (0) target = $region9
    $region8: #{tpu_custom_call.1} parent=1 // pred_region
      _
    $region9: #{tpu_custom_call.1} parent=1 // pred_fallthru
      _
    // Predicated region
    $region10: #{tpu_custom_call.1} parent=1 // pred_check
      _
    $region11: #{tpu_custom_call.1} parent=1 // pred_check_branch
      %16 = sbr.rel (0) target = $region13
    $region12: #{tpu_custom_call.1} parent=1 // pred_region
      _
    $region13: #{tpu_custom_call.1} parent=1 // pred_fallthru
      _
    // Predicated region
    $region14: #{tpu_custom_call.1} parent=1 // pred_check
      _
    $region15: #{tpu_custom_call.1} parent=1 // pred_check_branch
      %18 = sbr.rel (0) target = $region17
    $region16: #{tpu_custom_call.1} parent=1 // pred_region
      _
    $region17: #{tpu_custom_call.1} parent=1 // pred_fallthru
      _
    // Predicated region
    $region18: #{tpu_custom_call.1} parent=1 // pred_check
      _
    $region19: #{tpu_custom_call.1} parent=1 // pred_check_branch
      %20 = sbr.rel (0) target = $region21
    $region20: #{tpu_custom_call.1} parent=1 // pred_region
      _
    $region21: #{tpu_custom_call.1} parent=1 // pred_fallthru
      _
    %v21 = vld [vmem:[%s0] sm:$0x7]
    %v22 = vld [vmem:[%s1] sm:$0xff]
    %v23 = vld [vmem:[%s1 + $0x8] sm:$0xff]
    %v24 = vld [vmem:[%s1 + $0x10] sm:$0xff]
    %v25 = vld [vmem:[%s1 + $0x18] sm:$0xff]
    %27 = vset.pattern.permute.xlu0 0
    %28 = vperm.xlu0 %27, %v22
    %v29 = vpop.permute.xlu0 %28
    %32 = vset.pattern.permute.xlu0 0
    %33 = vperm.xlu0 %32, %v23
    %v34 = vpop.permute.xlu0 %33
    %37 = vset.pattern.permute.xlu0 0
    %38 = vperm.xlu0 %37, %v24
    %v39 = vpop.permute.xlu0 %38
    %42 = vset.pattern.permute.xlu0 0
    %43 = vperm.xlu0 %42, %v25
    %v44 = vpop.permute.xlu0 %43
    %v46 = vlaneseq
    %v47 = vshrl.u32 %v46, 7
    %v48 = vsub.s32 0, %v47
    %v49 = vrot.slane %v21, %v48
    %v50 = vmul.f32 %v29, %v49
    %v51 = vmul.f32 %v34, %v49
    %v52 = vmul.f32 %v39, %v49
    %v53 = vmul.f32 %v44, %v49
    %54 = vset.pattern.permute.xlu0 1
    %55 = vperm.xlu0 %54, %v22
    %v56 = vpop.permute.xlu0 %55
    %58 = vset.pattern.permute.xlu0 1
    %59 = vperm.xlu0 %58, %v23
    %v60 = vpop.permute.xlu0 %59
    %62 = vset.pattern.permute.xlu0 1
    %63 = vperm.xlu0 %62, %v24
    %v64 = vpop.permute.xlu0 %63
    %66 = vset.pattern.permute.xlu0 1
    %67 = vperm.xlu0 %66, %v25
    %v68 = vpop.permute.xlu0 %67
    %v70 = vlaneseq
    %v71 = vshrl.u32 %v70, 7
    %v72 = vsub.s32 1, %v71
    %v73 = vrot.slane %v21, %v72
    %v74 = vmul.f32 %v56, %v73
    %v75 = vmul.f32 %v60, %v73
    %v76 = vmul.f32 %v64, %v73
    %v77 = vmul.f32 %v68, %v73
    %v78 = vadd.f32 %v50, %v74
    %v79 = vadd.f32 %v51, %v75
    %v80 = vadd.f32 %v52, %v76
    %v81 = vadd.f32 %v53, %v77
    %82 = vset.pattern.permute.xlu0 2
    %83 = vperm.xlu0 %82, %v22
    %v84 = vpop.permute.xlu0 %83
    %86 = vset.pattern.permute.xlu0 2
    %87 = vperm.xlu0 %86, %v23
    %v88 = vpop.permute.xlu0 %87
    %90 = vset.pattern.permute.xlu0 2
    %91 = vperm.xlu0 %90, %v24
    %v92 = vpop.permute.xlu0 %91
    %94 = vset.pattern.permute.xlu0 2
    %95 = vperm.xlu0 %94, %v25
    %v96 = vpop.permute.xlu0 %95
    %v98 = vlaneseq
    %v99 = vshrl.u32 %v98, 7
    %v100 = vsub.s32 2, %v99
    %v101 = vrot.slane %v21, %v100
    %v102 = vmul.f32 %v84, %v101
    %v103 = vmul.f32 %v88, %v101
    %v104 = vmul.f32 %v92, %v101
    %v105 = vmul.f32 %v96, %v101
    %v106 = vadd.f32 %v78, %v102
    %v107 = vadd.f32 %v79, %v103
    %v108 = vadd.f32 %v80, %v104
    %v109 = vadd.f32 %v81, %v105
    %v110 = vld [vmem:[%s2] sm:$0xff]
    %v111 = vld [vmem:[%s2 + $0x8] sm:$0xff]
    %v112 = vld [vmem:[%s2 + $0x10] sm:$0xff]
    %v113 = vld [vmem:[%s2 + $0x18] sm:$0xff]
    %115 = vset.pattern.permute.xlu0 0
    %116 = vperm.xlu0 %115, %v110
    %v117 = vpop.permute.xlu0 %116
    %120 = vset.pattern.permute.xlu0 0
    %121 = vperm.xlu0 %120, %v111
    %v122 = vpop.permute.xlu0 %121
    %125 = vset.pattern.permute.xlu0 0
    %126 = vperm.xlu0 %125, %v112
    %v127 = vpop.permute.xlu0 %126
    %130 = vset.pattern.permute.xlu0 0
    %131 = vperm.xlu0 %130, %v113
    %v132 = vpop.permute.xlu0 %131
    %v134 = vadd.f32 %v106, %v117
    %v135 = vadd.f32 %v107, %v122
    %v136 = vadd.f32 %v108, %v127
    %v137 = vadd.f32 %v109, %v132
    %v138 = vmax.f32 %v134, 0.0
    %v139 = vmax.f32 %v135, 0.0
    %v140 = vmax.f32 %v136, 0.0
    %v141 = vmax.f32 %v137, 0.0
    %v142 = vld [vmem:[%s3] sm:$0x3]
    %v143 = vld [vmem:[%s4] sm:$0x3]
    %145 = vset.pattern.permute.xlu0 0
    %146 = vperm.xlu0 %145, %v143
    %v147 = vpop.permute.xlu0 %146
    %vm149 = vcmask 261120
    %v151 = vsel %vm149, %v142, 0
    %153 = vmatprep.subr.mxu0 0.0
    %154 = vmatpush1.msra.mxu0 %v138
    %155 = vmatprep.subr.mxu0 0.0
    %156 = vmatpush1.msra.mxu0 %v139
    %157 = vmatprep.subr.mxu0 0.0
    %158 = vmatpush1.msra.mxu0 %v140
    %159 = vmatprep.subr.mxu0 0.0
    %160 = vmatpush1.msra.mxu0 %v141
    %161 = vmatprep.subr.mxu0 0.0
    %162 = vmatpush1.msra.mxu0 0.0
    %163 = vmatprep.subr.mxu0 0.0
    %164 = vmatpush1.msra.mxu0 0.0
    %165 = vmatprep.subr.mxu0 0.0
    %166 = vmatpush1.msra.mxu0 0.0
    %167 = vmatprep.subr.mxu0 0.0
    %168 = vmatpush1.msra.mxu0 0.0
    %169 = vmatprep.subr.mxu0 0.0
    %170 = vmatpush1.msra.mxu0 0.0
    %171 = vmatprep.subr.mxu0 0.0
    %172 = vmatpush1.msra.mxu0 0.0
    %173 = vmatprep.subr.mxu0 0.0
    %174 = vmatpush1.msra.mxu0 0.0
    %175 = vmatprep.subr.mxu0 0.0
    %176 = vmatpush1.msra.mxu0 0.0
    %177 = vmatprep.subr.mxu0 0.0
    %178 = vmatpush1.msra.mxu0 0.0
    %179 = vmatprep.subr.mxu0 0.0
    %180 = vmatpush1.msra.mxu0 0.0
    %181 = vmatprep.subr.mxu0 0.0
    %182 = vmatpush1.msra.mxu0 0.0
    %183 = vmatprep.subr.mxu0 0.0
    %184 = vmatpush1.msra.mxu0 0.0
    %185 = vmatprep.subr.mxu0 0.0
    %186 = vmatpush1.msra.mxu0 0.0
    %187 = vmatprep.subr.mxu0 0.0
    %188 = vmatpush1.msra.mxu0 0.0
    %189 = vmatprep.subr.mxu0 0.0
    %190 = vmatpush1.msra.mxu0 0.0
    %191 = vmatprep.subr.mxu0 0.0
    %192 = vmatpush1.msra.mxu0 0.0
    %193 = vmatprep.subr.mxu0 0.0
    %194 = vmatpush1.msra.mxu0 0.0
    %195 = vmatprep.subr.mxu0 0.0
    %196 = vmatpush1.msra.mxu0 0.0
    %197 = vmatprep.subr.mxu0 0.0
    %198 = vmatpush1.msra.mxu0 0.0
    %199 = vmatprep.subr.mxu0 0.0
    %200 = vmatpush1.msra.mxu0 0.0
    %201 = vmatprep.subr.mxu0 0.0
    %202 = vmatpush1.msra.mxu0 0.0
    %203 = vmatprep.subr.mxu0 0.0
    %204 = vmatpush1.msra.mxu0 0.0
    %205 = vmatprep.subr.mxu0 0.0
    %206 = vmatpush1.msra.mxu0 0.0
    %207 = vmatprep.subr.mxu0 0.0
    %208 = vmatpush1.msra.mxu0 0.0
    %209 = vmatprep.subr.mxu0 0.0
    %210 = vmatpush1.msra.mxu0 0.0
    %211 = vmatprep.subr.mxu0 0.0
    %212 = vmatpush1.msra.mxu0 0.0
    %213 = vmatprep.subr.mxu0 0.0
    %214 = vmatpush1.msra.mxu0 0.0
    %215 = vmatprep.subr.mxu0 0.0
    %216 = vmatpush1.msra.mxu0 0.0
    %217 = vmatprep.mubr.f32.mxu0 0.0
    %218 = vmatmul.mubr.f32.gmra.mrb[0].mxu0 %v151
    %v219 = vpop.f32.mrb[0].mxu0
    %v220 = vadd.f32 %v147, %v219
    %v221 = vpop.f32.mrb[0].mxu0
    %222 = vdwg.mxu0
    %v223 = vlaneseq
    %v224 = vshrl.u32 %v223, 7
    %vm225 = vcmp.eq.s32.totalorder %v224, 0
    %v226 = vmax.f32 %v220, 0.0
    %v227 = vadd.f32 %v226, 1e-08
    %v228 = vsel %vm225, %v220, %v227
    %vm229 = vcmask 58368
    %230 = vst.msk [vmem:[#allocation2] sm:$0x3] %vm229, %v228
    // Predicated region
    $region22: #{tpu_custom_call.1} parent=1 // pred_check
      _
    $region23: #{tpu_custom_call.1} parent=1 // pred_check_branch
      %232 = sbr.rel (0) target = $region25
    $region24: #{tpu_custom_call.1} parent=1 // pred_region
      %s234 = ssub.s32 32, 32
      %235 = vsyncadd [#allocation3], %s234
      %s237 = sshll.u32 [#allocation2], 4
      %s238 = int_to_ptr.vmem [resolvable:$true] %s237
      %240 = dma.vmem_to_hbm [thread:$0]  %s238, 32, %s5, [#allocation3]
    $region25: #{tpu_custom_call.1} parent=1 // pred_fallthru
      _
    // Predicated region
    $region26: #{tpu_custom_call.1} parent=1 // pred_check
      _
    $region27: #{tpu_custom_call.1} parent=1 // pred_check_branch
      %242 = sbr.rel (0) target = $region29
    $region28: #{tpu_custom_call.1} parent=1 // pred_region
      %243 = dma.done [#allocation3], 32
    $region29: #{tpu_custom_call.1} parent=1 // pred_fallthru
      _
    %244 = vsyncpa [#allocation3], 1

</llo_original>
